<compile_context>
chip_gen: v6e
topology: v6e:2x2x1
jax: 0.10.0
libtpu: 0.0.40
codegen_flags: <defaults>
</compile_context>

<pallas_src>
import functools

import jax
import jax.numpy as jnp
from jax.experimental import pallas as pl
from jax.experimental.pallas import tpu as pltpu


def _round_up(x, m):
    return ((x + m - 1) // m) * m


# ---------------------------------------------------------------------------
# Kernels
# ---------------------------------------------------------------------------
def _seq_fwd_kernel(P, N, x_ref, wx_ref, b1_ref, wh1_ref, b2_ref,
                    wh2_ref, bc_ref, out_ref):
    """seqModel.forward (previous=False) for one batch tile.

    Packed weights (built once in the wrapper):
      wx  = [W_init | W_new_x ]   : (D, P+N)  LHS = x
      wh1 = [W_new_h | W_cls_h1]  : (P, N+C)  LHS = intial_out
      wh2 = W_cls_h2              : (N, C)    LHS = mid_out
    """
    w_dt = wx_ref.dtype
    x = x_ref[...]

    # Fused x-LHS matmul (initial_layer + x-block of new_layer), f32 accumulation.
    xw = jnp.dot(x, wx_ref[...], preferred_element_type=jnp.float32)     # (tb, P+N)

    # intial_out = ReLU(x @ W_init + b_init)   (activation math in f32)
    h1 = jnp.maximum(xw[:, :P] + b1_ref[...], 0.0)                        # (tb, P)

    # Fused intial_out-LHS matmul (h1-block of new_layer + h1-block of classifier).
    h1w = jnp.dot(h1.astype(w_dt), wh1_ref[...],
                  preferred_element_type=jnp.float32)                     # (tb, N+C)

    # mid_out = ReLU(cat(intial_out, x) @ W_new + b_new)
    h2 = jnp.maximum(xw[:, P:] + h1w[:, :N] + b2_ref[...], 0.0)           # (tb, N)

    # output = cat(intial_out, mid_out) @ W_cls + b_cls
    out = (h1w[:, N:]
           + jnp.dot(h2.astype(w_dt), wh2_ref[...],
                     preferred_element_type=jnp.float32)
           + bc_ref[...])
    out_ref[...] = out.astype(out_ref.dtype)


def _seq_prev_kernel(x_ref, w1_ref, b1_ref, wcp_ref, bcp_ref, out_ref):
    """seqModel.prev_forward: classifier_layer(intial_layer(x))."""
    w_dt = w1_ref.dtype
    h1 = jnp.maximum(
        jnp.dot(x_ref[...], w1_ref[...], preferred_element_type=jnp.float32)
        + b1_ref[...], 0.0)
    out = (jnp.dot(h1.astype(w_dt), wcp_ref[...],
                   preferred_element_type=jnp.float32)
           + bcp_ref[...])
    out_ref[...] = out.astype(out_ref.dtype)


# ---------------------------------------------------------------------------
# Wrapper
# ---------------------------------------------------------------------------
def seq_forward(x, params, *, previous=False, tile_b=512,
                compute_dtype=jnp.float32):
    B, D = x.shape
    P = params["b1"].shape[-1]     # previous_output
    N = params["b2"].shape[-1]     # net_size
    C = params["bc"].shape[-1]     # num_classes

    # Batch tiling: tb rows per grid step (multiple of 8 sublanes); pad B up.
    tb = min(_round_up(tile_b, 8), _round_up(B, 8))
    Bp = _round_up(B, tb)
    if Bp != B:
        x = jnp.pad(x, ((0, Bp - B), (0, 0)))
    grid = (Bp // tb,)

    cast = lambda a: a.astype(compute_dtype)
    x = cast(x)

    def full(arr):   # weights/biases: whole-array block, VMEM-resident across grid
        return pl.BlockSpec(arr.shape, lambda i: (0,) * arr.ndim)

    if previous:
        w1, wcp = cast(params["w1"]), cast(params["wcp"])
        b1 = params["b1"].astype(jnp.float32)
        bcp = params["bcp"].astype(jnp.float32)
        kernel = _seq_prev_kernel
        ins = (x, w1, b1, wcp, bcp)
        in_specs = [pl.BlockSpec((tb, D), lambda i: (i, 0)),
                    full(w1), full(b1), full(wcp), full(bcp)]
    else:
        # Pack weights once (outside the kernel); biases stay f32.
        wx = cast(jnp.concatenate([params["w1"], params["w2x"]], axis=1))    # (D, P+N)
        wh1 = cast(jnp.concatenate([params["w2h"], params["wch1"]], axis=1))  # (P, N+C)
        wh2 = cast(params["wch2"])                                            # (N, C)
        b1 = params["b1"].astype(jnp.float32)
        b2 = params["b2"].astype(jnp.float32)
        bc = params["bc"].astype(jnp.float32)
        kernel = functools.partial(_seq_fwd_kernel, P, N)
        ins = (x, wx, b1, wh1, b2, wh2, bc)
        in_specs = [pl.BlockSpec((tb, D), lambda i: (i, 0)),
                    full(wx), full(b1), full(wh1), full(b2), full(wh2), full(bc)]

    out = pl.pallas_call(
        kernel,
        out_shape=jax.ShapeDtypeStruct((Bp, C), jnp.float32),
        grid=grid,
        in_specs=in_specs,
        out_specs=pl.BlockSpec((tb, C), lambda i: (i, 0)),
        compiler_params=pltpu.CompilerParams(
            dimension_semantics=("parallel",),
            vmem_limit_bytes=32 * 1024 * 1024),
    )(*ins)
    return out[:B]


# ---------------------------------------------------------------------------
# Params + plain-JAX reference
# ---------------------------------------------------------------------------
def init_params(key, D, P, N, C):
    """PyTorch-Linear-style init (uniform +-1/sqrt(fan_in)), weights stored [in, out]."""
    assert N == P, "seqModel's classifier weight copy requires net_size == previous_output"
    ks = jax.random.split(key, 8)

    def lin(k, fan_in, shape):
        bound = 1.0 / (fan_in ** 0.5)
        return jax.random.uniform(k, shape, jnp.float32, -bound, bound)

    # prev_model.intial_layer: Linear(D, P) + ReLU
    w1 = lin(ks[0], D, (D, P));     b1 = lin(ks[1], D, (1, P))
    # prev_model.classifier_layer: Linear(P, C)
    wcp = lin(ks[2], P, (P, C));    bcp = lin(ks[3], P, (1, C))
    # new_layer: Linear(P + D, N) + ReLU, split into intial_out- and x- blocks
    w2h = lin(ks[4], P + D, (P, N)); w2x = lin(ks[5], P + D, (D, N))
    b2 = lin(ks[6], P + D, (1, N))
    # new_classifier_layer: Linear(P + N, C); first block & bias copied from prev
    # classifier (as in the PyTorch __init__), mid_out block freshly initialized.
    wch1 = wcp
    wch2 = lin(ks[7], P + N, (N, C))
    bc = bcp
    return dict(w1=w1, b1=b1, wcp=wcp, bcp=bcp,
                w2h=w2h, w2x=w2x, b2=b2, wch1=wch1, wch2=wch2, bc=bc)


def _dot(a, b):
    return jnp.dot(a, b, precision=jax.lax.Precision.HIGHEST,
                   preferred_element_type=jnp.float32)


def reference_forward(x, p, previous=False):
    h1 = jnp.maximum(_dot(x, p["w1"]) + p["b1"], 0.0)                  # intial_layer
    if previous:
        return _dot(h1, p["wcp"]) + p["bcp"]
    w_new = jnp.concatenate([p["w2h"], p["w2x"]], axis=0)              # cat(intial_out, x)
    h2 = jnp.maximum(_dot(jnp.concatenate([h1, x], axis=1), w_new) + p["b2"], 0.0)
    w_cls = jnp.concatenate([p["wch1"], p["wch2"]], axis=0)            # cat(intial_out, mid_out)
    return _dot(jnp.concatenate([h1, h2], axis=1), w_cls) + p["bc"]


if __name__ == "__main__":
    # batch, in_features, previous_output, net_size, num_classes
    B, D, P, N, C = 256, 32, 16, 16, 4
    key = jax.random.PRNGKey(0)
    kx, kp = jax.random.split(key)
    x = jax.random.normal(kx, (B, D), jnp.float32)
    params = init_params(kp, D, P, N, C)

    # f32 path (multi-step grid: tile_b=64 -> 4 grid steps).
    out = jax.block_until_ready(seq_forward(x, params, tile_b=64))
    ref = reference_forward(x, params)
    assert out.shape == (B, C)
    assert jnp.allclose(out, ref, atol=1e-4, rtol=1e-4)

    # previous=True path.
    out_prev = jax.block_until_ready(seq_forward(x, params, previous=True, tile_b=64))
    ref_prev = reference_forward(x, params, previous=True)
    assert jnp.allclose(out_prev, ref_prev, atol=1e-4, rtol=1e-4)

    # bf16 weight/activation streaming with f32 accumulation (v6e/v7x lever).
    out_bf16 = jax.block_until_ready(
        seq_forward(x, params, tile_b=64, compute_dtype=jnp.bfloat16))
    assert jnp.allclose(out_bf16, ref, atol=1e-1, rtol=1e-1)

    print("KERNEL_OK")
</pallas_src>

<mosaic_0001>
module attributes {stable_mosaic.version = 11 : i64} {
  func.func @_seq_fwd_kernel(%arg0: i32, %arg1: memref<64x32xf32, #tpu.memory_space<vmem>>, %arg2: memref<32x32xf32, #tpu.memory_space<vmem>>, %arg3: memref<1x16xf32, #tpu.memory_space<vmem>>, %arg4: memref<16x20xf32, #tpu.memory_space<vmem>>, %arg5: memref<1x16xf32, #tpu.memory_space<vmem>>, %arg6: memref<16x4xf32, #tpu.memory_space<vmem>>, %arg7: memref<1x4xf32, #tpu.memory_space<vmem>>, %arg8: memref<64x4xf32, #tpu.memory_space<vmem>>) attributes {dimension_semantics = [#tpu.dimension_semantics<parallel>], iteration_bounds = array<i64: 4>, scalar_prefetch = 0 : i64, scratch_operands = 0 : i64, tpu.core_type = #tpu.core_type<tc>, window_params = [{transform_indices = @transform_0, window_bounds = array<i64: 64, 32>}, {pipeline_mode = #tpu.pipeline_mode<synchronous>, transform_indices = @transform_1, window_bounds = array<i64: 32, 32>}, {pipeline_mode = #tpu.pipeline_mode<synchronous>, transform_indices = @transform_2, window_bounds = array<i64: 1, 16>}, {pipeline_mode = #tpu.pipeline_mode<synchronous>, transform_indices = @transform_3, window_bounds = array<i64: 16, 20>}, {pipeline_mode = #tpu.pipeline_mode<synchronous>, transform_indices = @transform_4, window_bounds = array<i64: 1, 16>}, {pipeline_mode = #tpu.pipeline_mode<synchronous>, transform_indices = @transform_5, window_bounds = array<i64: 16, 4>}, {pipeline_mode = #tpu.pipeline_mode<synchronous>, transform_indices = @transform_6, window_bounds = array<i64: 1, 4>}, {transform_indices = @transform_7, window_bounds = array<i64: 64, 4>}]} {
    %c0 = arith.constant 0 : index
    %c0_0 = arith.constant 0 : index
    %0 = vector.load %arg1[%c0, %c0_0] : memref<64x32xf32, #tpu.memory_space<vmem>>, vector<64x32xf32>
    %c0_1 = arith.constant 0 : index
    %c0_2 = arith.constant 0 : index
    %1 = vector.load %arg2[%c0_1, %c0_2] : memref<32x32xf32, #tpu.memory_space<vmem>>, vector<32x32xf32>
    %cst = arith.constant dense<0.000000e+00> : vector<64x32xf32>
    %2 = tpu.matmul %0, %1, %cst {dimension_numbers = #tpu.dot_dimension_numbers<[1], [0], [0], [1], [0, 0, 1, 1], [], []>} : vector<64x32xf32>, vector<32x32xf32>, vector<64x32xf32> -> vector<64x32xf32>
    %3 = vector.extract_strided_slice %2 {offsets = [0, 0], sizes = [64, 16], strides = [1, 1]} : vector<64x32xf32> to vector<64x16xf32>
    %c0_3 = arith.constant 0 : index
    %c0_4 = arith.constant 0 : index
    %4 = vector.load %arg3[%c0_3, %c0_4] : memref<1x16xf32, #tpu.memory_space<vmem>>, vector<1x16xf32>
    %5 = vector.broadcast %4 : vector<1x16xf32> to vector<64x16xf32>
    %6 = arith.addf %3, %5 : vector<64x16xf32>
    %cst_5 = arith.constant 0.000000e+00 : f32
    %7 = vector.broadcast %cst_5 : f32 to vector<64x16xf32>
    %8 = arith.maximumf %6, %7 : vector<64x16xf32>
    %c0_6 = arith.constant 0 : index
    %c0_7 = arith.constant 0 : index
    %9 = vector.load %arg4[%c0_6, %c0_7] : memref<16x20xf32, #tpu.memory_space<vmem>>, vector<16x20xf32>
    %cst_8 = arith.constant dense<0.000000e+00> : vector<64x20xf32>
    %10 = tpu.matmul %8, %9, %cst_8 {dimension_numbers = #tpu.dot_dimension_numbers<[1], [0], [0], [1], [0, 0, 1, 1], [], []>} : vector<64x16xf32>, vector<16x20xf32>, vector<64x20xf32> -> vector<64x20xf32>
    %11 = vector.extract_strided_slice %2 {offsets = [0, 16], sizes = [64, 16], strides = [1, 1]} : vector<64x32xf32> to vector<64x16xf32>
    %12 = vector.extract_strided_slice %10 {offsets = [0, 0], sizes = [64, 16], strides = [1, 1]} : vector<64x20xf32> to vector<64x16xf32>
    %13 = arith.addf %11, %12 : vector<64x16xf32>
    %c0_9 = arith.constant 0 : index
    %c0_10 = arith.constant 0 : index
    %14 = vector.load %arg5[%c0_9, %c0_10] : memref<1x16xf32, #tpu.memory_space<vmem>>, vector<1x16xf32>
    %15 = vector.broadcast %14 : vector<1x16xf32> to vector<64x16xf32>
    %16 = arith.addf %13, %15 : vector<64x16xf32>
    %cst_11 = arith.constant 0.000000e+00 : f32
    %17 = vector.broadcast %cst_11 : f32 to vector<64x16xf32>
    %18 = arith.maximumf %16, %17 : vector<64x16xf32>
    %19 = vector.extract_strided_slice %10 {offsets = [0, 16], sizes = [64, 4], strides = [1, 1]} : vector<64x20xf32> to vector<64x4xf32>
    %c0_12 = arith.constant 0 : index
    %c0_13 = arith.constant 0 : index
    %20 = vector.load %arg6[%c0_12, %c0_13] : memref<16x4xf32, #tpu.memory_space<vmem>>, vector<16x4xf32>
    %cst_14 = arith.constant dense<0.000000e+00> : vector<64x4xf32>
    %21 = tpu.matmul %18, %20, %cst_14 {dimension_numbers = #tpu.dot_dimension_numbers<[1], [0], [0], [1], [0, 0, 1, 1], [], []>} : vector<64x16xf32>, vector<16x4xf32>, vector<64x4xf32> -> vector<64x4xf32>
    %22 = arith.addf %19, %21 : vector<64x4xf32>
    %c0_15 = arith.constant 0 : index
    %c0_16 = arith.constant 0 : index
    %23 = vector.load %arg7[%c0_15, %c0_16] : memref<1x4xf32, #tpu.memory_space<vmem>>, vector<1x4xf32>
    %24 = vector.broadcast %23 : vector<1x4xf32> to vector<64x4xf32>
    %25 = arith.addf %22, %24 : vector<64x4xf32>
    %c0_17 = arith.constant 0 : index
    %c0_18 = arith.constant 0 : index
    %26 = vector.load %arg8[%c0_17, %c0_18] : memref<64x4xf32, #tpu.memory_space<vmem>>, vector<64x4xf32>
    tpu.vector_store %arg8[%c0_17, %c0_18], %25 {strides = array<i32>} : memref<64x4xf32, #tpu.memory_space<vmem>>, vector<64x4xf32>,
    return
  }
  func.func @transform_0(%arg0: i32) -> (i32, i32) {
    %c0_i32 = arith.constant 0 : i32
    %c0_i32_0 = arith.constant 0 : i32
    return %arg0, %c0_i32 : i32, i32
  }
  func.func @transform_1(%arg0: i32) -> (i32, i32) {
    %c0_i32 = arith.constant 0 : i32
    %c0_i32_0 = arith.constant 0 : i32
    %c0_i32_1 = arith.constant 0 : i32
    return %c0_i32, %c0_i32_0 : i32, i32
  }
  func.func @transform_2(%arg0: i32) -> (i32, i32) {
    %c0_i32 = arith.constant 0 : i32
    %c0_i32_0 = arith.constant 0 : i32
    %c0_i32_1 = arith.constant 0 : i32
    return %c0_i32, %c0_i32_0 : i32, i32
  }
  func.func @transform_3(%arg0: i32) -> (i32, i32) {
    %c0_i32 = arith.constant 0 : i32
    %c0_i32_0 = arith.constant 0 : i32
    %c0_i32_1 = arith.constant 0 : i32
    return %c0_i32, %c0_i32_0 : i32, i32
  }
  func.func @transform_4(%arg0: i32) -> (i32, i32) {
    %c0_i32 = arith.constant 0 : i32
    %c0_i32_0 = arith.constant 0 : i32
    %c0_i32_1 = arith.constant 0 : i32
    return %c0_i32, %c0_i32_0 : i32, i32
  }
  func.func @transform_5(%arg0: i32) -> (i32, i32) {
    %c0_i32 = arith.constant 0 : i32
    %c0_i32_0 = arith.constant 0 : i32
    %c0_i32_1 = arith.constant 0 : i32
    return %c0_i32, %c0_i32_0 : i32, i32
  }
  func.func @transform_6(%arg0: i32) -> (i32, i32) {
    %c0_i32 = arith.constant 0 : i32
    %c0_i32_0 = arith.constant 0 : i32
    %c0_i32_1 = arith.constant 0 : i32
    return %c0_i32, %c0_i32_0 : i32, i32
  }
  func.func @transform_7(%arg0: i32) -> (i32, i32) {
    %c0_i32 = arith.constant 0 : i32
    %c0_i32_0 = arith.constant 0 : i32
    return %arg0, %c0_i32 : i32, i32
  }
}

</mosaic_0001>

<llo_original>
// kernel: tpu_custom_call.1
$region0: #{tpu_custom_call.1}
  #allocation0 [shape = 'u32[]', space=smem, size = 0x4, offset = 0x4, fixed_abs, tag = 'smem constant byte address 0x4 - core index']
  #allocation1 [shape = 'u32[144,128]{1,0:T(1,128)}', space=vmem, size = 0x12000, scoped, tag = 'internal scratch']
  %s0 = inlined_call_operand.vmem [shape: f32[256,32], index: 0, kind: input, shape index: {}]
  %s1 = inlined_call_operand.vmem [shape: f32[32,32], index: 1, kind: input, shape index: {}]
  %s2 = inlined_call_operand.vmem [shape: f32[1,16], index: 2, kind: input, shape index: {}]
  %s3 = inlined_call_operand.vmem [shape: f32[16,20], index: 3, kind: input, shape index: {}]
  %s4 = inlined_call_operand.vmem [shape: f32[1,16], index: 4, kind: input, shape index: {}]
  %s5 = inlined_call_operand.vmem [shape: f32[16,4], index: 5, kind: input, shape index: {}]
  %s6 = inlined_call_operand.vmem [shape: f32[1,4], index: 6, kind: input, shape index: {}]
  %s7 = inlined_call_operand.vmem [shape: f32[256,4], index: 7, kind: output, shape index: {}]
  %s8 = sld [smem:[#allocation0]]
  $region61: #{tpu_custom_call.1} parent=0
    _
  %s10 = ssub.s32 1, %s8
  %s11 = scalar_select 0, %s10, %s8
  loop: start=0, step=1, limit=6
  $region2: #{tpu_custom_call.1} parent=0 // loop_pre_header
    _
  $region3: #{tpu_custom_call.1} parent=0 // loop_header
    %s13 = sphi 0, %s17
    %p14 = scmp.ge.s32.totalorder %s13, 6
    %s23 = sphi 0, %s25
    %s26 = sphi 0, %s23
    %s27 = sphi 0, %s26
    %s43 = sphi 0, %s27
    %s47 = sphi 0, %s47
    %s49 = sphi 0, %s47
    %s50 = sphi 0, %s49
    %s64 = sphi 0, %s50
    %s68 = sphi 0, %s68
    %s70 = sphi 0, %s68
    %s71 = sphi 0, %s70
    %s85 = sphi 0, %s71
    %s89 = sphi 0, %s89
    %s91 = sphi 0, %s89
    %s92 = sphi 0, %s91
    %s106 = sphi 0, %s92
    %s110 = sphi 0, %s110
    %s112 = sphi 0, %s110
    %s113 = sphi 0, %s112
    %s127 = sphi 0, %s113
    %s131 = sphi 0, %s131
    %s133 = sphi 0, %s131
    %s134 = sphi 0, %s133
    %s148 = sphi 0, %s134
    %s152 = sphi 0, %s152
    %s154 = sphi 0, %s152
    %s155 = sphi 0, %s154
    %s169 = sphi 0, %s155
    %s175 = sphi 0, %s177
    %s178 = sphi 0, %s175
    %s179 = sphi 0, %s178
    %s195 = sphi 0, %s179
  $region4: #{tpu_custom_call.1} parent=0 // loop_header_branch
    %16 = sbr.rel (%p14) target = $region8
  $region5: #{tpu_custom_call.1} parent=0 // loop_body
    %s18 = ssub.s32 %s13, 1
    %s19 = ssub.s32 %s13, 2
    %s20 = sadd.s32 %s13, 1
    %s21 = ssub.s32 %s13, %s20
    %p22 = scmp.eq.s32.totalorder %s21, 0
    %s24 = sadd.s32 %s23, 1
    %s25 = scalar_select %p22, %s23, %s24
    %p28 = pneg %p22
    %p29 = scmp.eq.s32.totalorder %s13, 3
    %p30 = por %p28, %p29
    %p31 = scmp.ne.s32.totalorder %s23, %s26
    %p32 = scmp.eq.s32.totalorder %s13, 0
    %p33 = por %p31, %p32
    %p34 = scmp.ne.s32.totalorder %s23, %s26
    %p35 = scmp.eq.s32.totalorder %s18, 3
    %p36 = por %p34, %p35
    %p37 = scmp.ne.s32.totalorder %s26, %s27
    %p38 = scmp.eq.s32.totalorder %s18, 0
    %p39 = por %p37, %p38
    %p40 = scmp.ne.s32.totalorder %s26, %s27
    %p41 = scmp.eq.s32.totalorder %s19, 3
    %p42 = por %p40, %p41
    %p44 = scmp.ne.s32.totalorder %s27, %s43
    %p45 = scmp.eq.s32.totalorder %s19, 0
    %p46 = por %p44, %p45
    %s48 = sadd.s32 %s47, 1
    %p51 = scmp.eq.s32.totalorder %s13, 3
    %p52 = scmp.ne.s32.totalorder %s47, %s49
    %p53 = scmp.eq.s32.totalorder %s13, 0
    %p54 = por %p52, %p53
    %p55 = scmp.ne.s32.totalorder %s47, %s49
    %p56 = scmp.eq.s32.totalorder %s18, 3
    %p57 = por %p55, %p56
    %p58 = scmp.ne.s32.totalorder %s49, %s50
    %p59 = scmp.eq.s32.totalorder %s18, 0
    %p60 = por %p58, %p59
    %p61 = scmp.ne.s32.totalorder %s49, %s50
    %p62 = scmp.eq.s32.totalorder %s19, 3
    %p63 = por %p61, %p62
    %p65 = scmp.ne.s32.totalorder %s50, %s64
    %p66 = scmp.eq.s32.totalorder %s19, 0
    %p67 = por %p65, %p66
    %s69 = sadd.s32 %s68, 1
    %p72 = scmp.eq.s32.totalorder %s13, 3
    %p73 = scmp.ne.s32.totalorder %s68, %s70
    %p74 = scmp.eq.s32.totalorder %s13, 0
    %p75 = por %p73, %p74
    %p76 = scmp.ne.s32.totalorder %s68, %s70
    %p77 = scmp.eq.s32.totalorder %s18, 3
    %p78 = por %p76, %p77
    %p79 = scmp.ne.s32.totalorder %s70, %s71
    %p80 = scmp.eq.s32.totalorder %s18, 0
    %p81 = por %p79, %p80
    %p82 = scmp.ne.s32.totalorder %s70, %s71
    %p83 = scmp.eq.s32.totalorder %s19, 3
    %p84 = por %p82, %p83
    %p86 = scmp.ne.s32.totalorder %s71, %s85
    %p87 = scmp.eq.s32.totalorder %s19, 0
    %p88 = por %p86, %p87
    %s90 = sadd.s32 %s89, 1
    %p93 = scmp.eq.s32.totalorder %s13, 3
    %p94 = scmp.ne.s32.totalorder %s89, %s91
    %p95 = scmp.eq.s32.totalorder %s13, 0
    %p96 = por %p94, %p95
    %p97 = scmp.ne.s32.totalorder %s89, %s91
    %p98 = scmp.eq.s32.totalorder %s18, 3
    %p99 = por %p97, %p98
    %p100 = scmp.ne.s32.totalorder %s91, %s92
    %p101 = scmp.eq.s32.totalorder %s18, 0
    %p102 = por %p100, %p101
    %p103 = scmp.ne.s32.totalorder %s91, %s92
    %p104 = scmp.eq.s32.totalorder %s19, 3
    %p105 = por %p103, %p104
    %p107 = scmp.ne.s32.totalorder %s92, %s106
    %p108 = scmp.eq.s32.totalorder %s19, 0
    %p109 = por %p107, %p108
    %s111 = sadd.s32 %s110, 1
    %p114 = scmp.eq.s32.totalorder %s13, 3
    %p115 = scmp.ne.s32.totalorder %s110, %s112
    %p116 = scmp.eq.s32.totalorder %s13, 0
    %p117 = por %p115, %p116
    %p118 = scmp.ne.s32.totalorder %s110, %s112
    %p119 = scmp.eq.s32.totalorder %s18, 3
    %p120 = por %p118, %p119
    %p121 = scmp.ne.s32.totalorder %s112, %s113
    %p122 = scmp.eq.s32.totalorder %s18, 0
    %p123 = por %p121, %p122
    %p124 = scmp.ne.s32.totalorder %s112, %s113
    %p125 = scmp.eq.s32.totalorder %s19, 3
    %p126 = por %p124, %p125
    %p128 = scmp.ne.s32.totalorder %s113, %s127
    %p129 = scmp.eq.s32.totalorder %s19, 0
    %p130 = por %p128, %p129
    %s132 = sadd.s32 %s131, 1
    %p135 = scmp.eq.s32.totalorder %s13, 3
    %p136 = scmp.ne.s32.totalorder %s131, %s133
    %p137 = scmp.eq.s32.totalorder %s13, 0
    %p138 = por %p136, %p137
    %p139 = scmp.ne.s32.totalorder %s131, %s133
    %p140 = scmp.eq.s32.totalorder %s18, 3
    %p141 = por %p139, %p140
    %p142 = scmp.ne.s32.totalorder %s133, %s134
    %p143 = scmp.eq.s32.totalorder %s18, 0
    %p144 = por %p142, %p143
    %p145 = scmp.ne.s32.totalorder %s133, %s134
    %p146 = scmp.eq.s32.totalorder %s19, 3
    %p147 = por %p145, %p146
    %p149 = scmp.ne.s32.totalorder %s134, %s148
    %p150 = scmp.eq.s32.totalorder %s19, 0
    %p151 = por %p149, %p150
    %s153 = sadd.s32 %s152, 1
    %p156 = scmp.eq.s32.totalorder %s13, 3
    %p157 = scmp.ne.s32.totalorder %s152, %s154
    %p158 = scmp.eq.s32.totalorder %s13, 0
    %p159 = por %p157, %p158
    %p160 = scmp.ne.s32.totalorder %s152, %s154
    %p161 = scmp.eq.s32.totalorder %s18, 3
    %p162 = por %p160, %p161
    %p163 = scmp.ne.s32.totalorder %s154, %s155
    %p164 = scmp.eq.s32.totalorder %s18, 0
    %p165 = por %p163, %p164
    %p166 = scmp.ne.s32.totalorder %s154, %s155
    %p167 = scmp.eq.s32.totalorder %s19, 3
    %p168 = por %p166, %p167
    %p170 = scmp.ne.s32.totalorder %s155, %s169
    %p171 = scmp.eq.s32.totalorder %s19, 0
    %p172 = por %p170, %p171
    %s173 = ssub.s32 %s13, %s20
    %p174 = scmp.eq.s32.totalorder %s173, 0
    %s176 = sadd.s32 %s175, 1
    %s177 = scalar_select %p174, %s175, %s176
    %p180 = pneg %p174
    %p181 = scmp.eq.s32.totalorder %s13, 3
    %p182 = por %p180, %p181
    %p183 = scmp.ne.s32.totalorder %s175, %s178
    %p184 = scmp.eq.s32.totalorder %s13, 0
    %p185 = por %p183, %p184
    %p186 = scmp.ne.s32.totalorder %s175, %s178
    %p187 = scmp.eq.s32.totalorder %s18, 3
    %p188 = por %p186, %p187
    %p189 = scmp.ne.s32.totalorder %s178, %s179
    %p190 = scmp.eq.s32.totalorder %s18, 0
    %p191 = por %p189, %p190
    %p192 = scmp.ne.s32.totalorder %s178, %s179
    %p193 = scmp.eq.s32.totalorder %s19, 3
    %p194 = por %p192, %p193
    %p196 = scmp.ne.s32.totalorder %s179, %s195
    %p197 = scmp.eq.s32.totalorder %s19, 0
    %p198 = por %p196, %p197
    %p199 = scmp.le.s32.totalorder 1, %s13
    %p200 = scmp.lt.s32.totalorder %s13, 5
    %p201 = pnand %p199, %p200
    %p202 = pneg %p201
    // Predicated region
    $region9: #{tpu_custom_call.1} parent=5 // pred_check
      _
    $region10: #{tpu_custom_call.1} parent=5 // pred_check_branch
      %204 = sbr.rel (%p201) target = $region12
    $region11: #{tpu_custom_call.1} parent=5 // pred_region
      %s205 = ssub.s32 %s13, 1
      // Predicated region
      $region13: #{tpu_custom_call.1} parent=11 // pred_check
        %p206 = pneg %p60
      $region14: #{tpu_custom_call.1} parent=11 // pred_check_branch
        %208 = sbr.rel (%p206) target = $region16
      $region15: #{tpu_custom_call.1} parent=11 // pred_region
        _
      $region16: #{tpu_custom_call.1} parent=11 // pred_fallthru
        _
      // Predicated region
      $region17: #{tpu_custom_call.1} parent=11 // pred_check
        %p209 = pneg %p81
      $region18: #{tpu_custom_call.1} parent=11 // pred_check_branch
        %211 = sbr.rel (%p209) target = $region20
      $region19: #{tpu_custom_call.1} parent=11 // pred_region
        _
      $region20: #{tpu_custom_call.1} parent=11 // pred_fallthru
        _
      // Predicated region
      $region21: #{tpu_custom_call.1} parent=11 // pred_check
        %p212 = pneg %p102
      $region22: #{tpu_custom_call.1} parent=11 // pred_check_branch
        %214 = sbr.rel (%p212) target = $region24
      $region23: #{tpu_custom_call.1} parent=11 // pred_region
        _
      $region24: #{tpu_custom_call.1} parent=11 // pred_fallthru
        _
      // Predicated region
      $region25: #{tpu_custom_call.1} parent=11 // pred_check
        %p215 = pneg %p123
      $region26: #{tpu_custom_call.1} parent=11 // pred_check_branch
        %217 = sbr.rel (%p215) target = $region28
      $region27: #{tpu_custom_call.1} parent=11 // pred_region
        _
      $region28: #{tpu_custom_call.1} parent=11 // pred_fallthru
        _
      // Predicated region
      $region29: #{tpu_custom_call.1} parent=11 // pred_check
        %p218 = pneg %p144
      $region30: #{tpu_custom_call.1} parent=11 // pred_check_branch
        %220 = sbr.rel (%p218) target = $region32
      $region31: #{tpu_custom_call.1} parent=11 // pred_region
        _
      $region32: #{tpu_custom_call.1} parent=11 // pred_fallthru
        _
      // Predicated region
      $region33: #{tpu_custom_call.1} parent=11 // pred_check
        %p221 = pneg %p165
      $region34: #{tpu_custom_call.1} parent=11 // pred_check_branch
        %223 = sbr.rel (%p221) target = $region36
      $region35: #{tpu_custom_call.1} parent=11 // pred_region
        _
      $region36: #{tpu_custom_call.1} parent=11 // pred_fallthru
        _
    $region12: #{tpu_custom_call.1} parent=5 // pred_fallthru
      _
    %p224 = scmp.lt.s32.totalorder %s13, 4
    // Predicated region
    $region37: #{tpu_custom_call.1} parent=5 // pred_check
      %p225 = pneg %p224
    $region38: #{tpu_custom_call.1} parent=5 // pred_check_branch
      %227 = sbr.rel (%p225) target = $region40
    $region39: #{tpu_custom_call.1} parent=5 // pred_region
      // Predicated region
      $region41: #{tpu_custom_call.1} parent=39 // pred_check
        %p228 = pneg %p33
      $region42: #{tpu_custom_call.1} parent=39 // pred_check_branch
        %230 = sbr.rel (%p228) target = $region44
      $region43: #{tpu_custom_call.1} parent=39 // pred_region
        %s231 = smul.u32 8, %s13
        %p232 = scmp.lt.s32.totalorder %s231, 31
        %s233 = scalar_select %p232, %s231, 31
        %s234 = smul.addr %s233, 8
        %s235 = scalar_lea.vmem %s0, %s234
        %s236 = smul.u32 8, %s13
      $region44: #{tpu_custom_call.1} parent=39 // pred_fallthru
        _
    $region40: #{tpu_custom_call.1} parent=5 // pred_fallthru
      _
    %p237 = scmp.le.s32.totalorder 1, %s13
    %p238 = scmp.lt.s32.totalorder %s13, 5
    %p239 = pnand %p237, %p238
    %p240 = pneg %p239
    // Predicated region
    $region45: #{tpu_custom_call.1} parent=5 // pred_check
      _
    $region46: #{tpu_custom_call.1} parent=5 // pred_check_branch
      %242 = sbr.rel (%p239) target = $region48
    $region47: #{tpu_custom_call.1} parent=5 // pred_region
      %s243 = ssub.s32 %s13, 1
      %s244 = smul.u32 8, %s18
      %p245 = scmp.lt.s32.totalorder %s244, 31
      %s246 = scalar_select %p245, %s244, 31
      %s247 = smul.addr %s246, 8
      %s248 = scalar_lea.vmem %s0, %s247
      %p249 = pneg %p39
      %p250 = pneg %p36
      %p251 = pneg %p60
      %p252 = pneg %p57
      %p253 = pneg %p81
      %p254 = pneg %p78
      %p255 = pneg %p102
      %p256 = pneg %p99
      %p257 = pneg %p123
      %p258 = pneg %p120
      %p259 = pneg %p144
      %p260 = pneg %p141
      %p261 = pneg %p165
      %p262 = pneg %p162
      %p263 = pneg %p191
      %p264 = pneg %p188
      %s265 = smul.u32 8, %s18
      %p266 = scmp.lt.s32.totalorder %s265, 31
      %s267 = scalar_select %p266, %s265, 31
      %s268 = smul.addr %s267, 8
      %s269 = scalar_lea.vmem %s7, %s268
      %s270 = smul.u32 8, %s18
      %p271 = scmp.lt.s32.totalorder %s270, 31
      %s272 = scalar_select %p271, %s270, 31
      %s273 = smul.addr %s272, 8
      %s274 = scalar_lea.vmem %s0, %s273
      %s275 = smul.u32 8, %s18
      %s276 = smul.u32 8, %s18
      %p277 = scmp.lt.s32.totalorder %s276, 31
      %s278 = scalar_select %p277, %s276, 31
      %s279 = smul.addr %s278, 8
      %s280 = scalar_lea.vmem %s7, %s279
      %s281 = smul.u32 8, %s18
      %v282 = vld [vmem:[%s274] sm:$0xff]
      %v283 = vld [vmem:[%s274 + $0x8] sm:$0xff]
      %v284 = vld [vmem:[%s274 + $0x10] sm:$0xff]
      %v285 = vld [vmem:[%s274 + $0x18] sm:$0xff]
      %v286 = vld [vmem:[%s274 + $0x20] sm:$0xff]
      %v287 = vld [vmem:[%s274 + $0x28] sm:$0xff]
      %v288 = vld [vmem:[%s274 + $0x30] sm:$0xff]
      %v289 = vld [vmem:[%s274 + $0x38] sm:$0xff]
      %v290 = vld [vmem:[%s1] sm:$0xff]
      %v291 = vld [vmem:[%s1 + $0x8] sm:$0xff]
      %v292 = vld [vmem:[%s1 + $0x10] sm:$0xff]
      %v293 = vld [vmem:[%s1 + $0x18] sm:$0xff]
      %vm294 = vcmask 261120
      %v296 = vsel %vm294, %v282, 0
      %v299 = vsel %vm294, %v283, 0
      %v302 = vsel %vm294, %v284, 0
      %v305 = vsel %vm294, %v285, 0
      %v308 = vsel %vm294, %v286, 0
      %v311 = vsel %vm294, %v287, 0
      %v314 = vsel %vm294, %v288, 0
      %v317 = vsel %vm294, %v289, 0
      %319 = vmatprep.subr.mxu0 0.0
      %320 = vmatpush1.msra.mxu0 0.0
      %321 = vmatprep.subr.mxu0 0.0
      %322 = vmatpush1.msra.mxu0 0.0
      %323 = vmatprep.subr.mxu0 0.0
      %324 = vmatpush1.msra.mxu0 0.0
      %325 = vmatprep.subr.mxu0 0.0
      %326 = vmatpush1.msra.mxu0 0.0
      %327 = vmatprep.subr.mxu0 0.0
      %328 = vmatpush1.msra.mxu0 0.0
      %329 = vmatprep.subr.mxu0 0.0
      %330 = vmatpush1.msra.mxu0 0.0
      %331 = vmatprep.subr.mxu0 0.0
      %332 = vmatpush1.msra.mxu0 0.0
      %333 = vmatprep.subr.mxu0 0.0
      %334 = vmatpush1.msra.mxu0 0.0
      %335 = vmatprep.subr.mxu0 0.0
      %336 = vmatpush1.msra.mxu0 0.0
      %337 = vmatprep.subr.mxu0 0.0
      %338 = vmatpush1.msra.mxu0 0.0
      %339 = vmatprep.subr.mxu0 0.0
      %340 = vmatpush1.msra.mxu0 0.0
      %341 = vmatprep.subr.mxu0 0.0
      %342 = vmatpush1.msra.mxu0 0.0
      %343 = vmatprep.subr.mxu0 0.0
      %344 = vmatpush1.msra.mxu0 %v293
      %345 = vmatprep.subr.mxu0 0.0
      %346 = vmatpush1.msra.mxu0 %v292
      %347 = vmatprep.subr.mxu0 0.0
      %348 = vmatpush1.msra.mxu0 %v291
      %349 = vmatprep.subr.mxu0 0.0
      %350 = vmatpush1.msra.mxu0 %v290
      %351 = vmatprep.subr.mxu0 0.0
      %352 = vmatpush2.msra.mxu0 0.0
      %353 = vmatprep.subr.mxu0 0.0
      %354 = vmatpush2.msra.mxu0 0.0
      %355 = vmatprep.subr.mxu0 0.0
      %356 = vmatpush2.msra.mxu0 0.0
      %357 = vmatprep.subr.mxu0 0.0
      %358 = vmatpush2.msra.mxu0 0.0
      %359 = vmatprep.subr.mxu0 0.0
      %360 = vmatpush2.msra.mxu0 0.0
      %361 = vmatprep.subr.mxu0 0.0
      %362 = vmatpush2.msra.mxu0 0.0
      %363 = vmatprep.subr.mxu0 0.0
      %364 = vmatpush2.msra.mxu0 0.0
      %365 = vmatprep.subr.mxu0 0.0
      %366 = vmatpush2.msra.mxu0 0.0
      %367 = vmatprep.subr.mxu0 0.0
      %368 = vmatpush2.msra.mxu0 0.0
      %369 = vmatprep.subr.mxu0 0.0
      %370 = vmatpush2.msra.mxu0 0.0
      %371 = vmatprep.subr.mxu0 0.0
      %372 = vmatpush2.msra.mxu0 0.0
      %373 = vmatprep.subr.mxu0 0.0
      %374 = vmatpush2.msra.mxu0 0.0
      %375 = vmatprep.subr.mxu0 0.0
      %376 = vmatpush2.msra.mxu0 0.0
      %377 = vmatprep.subr.mxu0 0.0
      %378 = vmatpush2.msra.mxu0 0.0
      %379 = vmatprep.subr.mxu0 0.0
      %380 = vmatpush2.msra.mxu0 0.0
      %381 = vmatprep.subr.mxu0 0.0
      %382 = vmatpush2.msra.mxu0 0.0
      %383 = vmatprep.mubr.f32.mxu0 0.0
      %384 = vmatmul.mubr.f32.gmra.mxu0 %v296
      %v385 = vpop.f32.mrf.mxu0
      %v386 = vadd.f32 0.0, %v385
      %v387 = vpop.f32.mrf.mxu0
      %388 = vmatprep.mubr.f32.mxu0 0.0
      %389 = vmatmul.mubr.f32.gmra.mxu0 %v299
      %v390 = vpop.f32.mrf.mxu0
      %v391 = vadd.f32 0.0, %v390
      %v392 = vpop.f32.mrf.mxu0
      %393 = vmatprep.mubr.f32.mxu0 0.0
      %394 = vmatmul.mubr.f32.gmra.mxu0 %v302
      %v395 = vpop.f32.mrf.mxu0
      %v396 = vadd.f32 0.0, %v395
      %v397 = vpop.f32.mrf.mxu0
      %398 = vmatprep.mubr.f32.mxu0 0.0
      %399 = vmatmul.mubr.f32.gmra.mxu0 %v305
      %v400 = vpop.f32.mrf.mxu0
      %v401 = vadd.f32 0.0, %v400
      %v402 = vpop.f32.mrf.mxu0
      %403 = vmatprep.mubr.f32.mxu0 0.0
      %404 = vmatmul.mubr.f32.gmra.mxu0 %v308
      %v405 = vpop.f32.mrf.mxu0
      %v406 = vadd.f32 0.0, %v405
      %v407 = vpop.f32.mrf.mxu0
      %408 = vmatprep.mubr.f32.mxu0 0.0
      %409 = vmatmul.mubr.f32.gmra.mxu0 %v311
      %v410 = vpop.f32.mrf.mxu0
      %v411 = vadd.f32 0.0, %v410
      %v412 = vpop.f32.mrf.mxu0
      %413 = vmatprep.mubr.f32.mxu0 0.0
      %414 = vmatmul.mubr.f32.gmra.mxu0 %v314
      %v415 = vpop.f32.mrf.mxu0
      %v416 = vadd.f32 0.0, %v415
      %v417 = vpop.f32.mrf.mxu0
      %418 = vmatprep.mubr.f32.mxu0 0.0
      %419 = vmatmul.mubr.f32.gmra.mxu0 %v317
      %v420 = vpop.f32.mrf.mxu0
      %v421 = vadd.f32 0.0, %v420
      %v422 = vpop.f32.mrf.mxu0
      %423 = vdwg.mxu0
      %v424 = vld [vmem:[%s2] sm:$0x1]
      %v426 = vlaneseq
      %v427 = vshrl.u32 %v426, 7
      %v428 = vsub.s32 0, %v427
      %v429 = vrot.slane %v424, %v428
      %v431 = vadd.f32 %v386, %v429
      %v432 = vadd.f32 %v391, %v429
      %v433 = vadd.f32 %v396, %v429
      %v434 = vadd.f32 %v401, %v429
      %v435 = vadd.f32 %v406, %v429
      %v436 = vadd.f32 %v411, %v429
      %v437 = vadd.f32 %v416, %v429
      %v438 = vadd.f32 %v421, %v429
      %v439 = vmax.f32 %v431, 0.0
      %v440 = vmax.f32 %v432, 0.0
      %v441 = vmax.f32 %v433, 0.0
      %v442 = vmax.f32 %v434, 0.0
      %v443 = vmax.f32 %v435, 0.0
      %v444 = vmax.f32 %v436, 0.0
      %v445 = vmax.f32 %v437, 0.0
      %v446 = vmax.f32 %v438, 0.0
      %v447 = vld [vmem:[%s3] sm:$0xff]
      %v448 = vld [vmem:[%s3 + $0x8] sm:$0xff]
      %vm449 = vcmask 130048
      %v451 = vsel %vm449, %v439, 0
      %v454 = vsel %vm449, %v440, 0
      %v457 = vsel %vm449, %v441, 0
      %v460 = vsel %vm449, %v442, 0
      %v463 = vsel %vm449, %v443, 0
      %v466 = vsel %vm449, %v444, 0
      %v469 = vsel %vm449, %v445, 0
      %v472 = vsel %vm449, %v446, 0
      %474 = vmatprep.subr.mxu0 0.0
      %475 = vmatpush1.msra.mxu0 0.0
      %476 = vmatprep.subr.mxu0 0.0
      %477 = vmatpush1.msra.mxu0 0.0
      %478 = vmatprep.subr.mxu0 0.0
      %479 = vmatpush1.msra.mxu0 0.0
      %480 = vmatprep.subr.mxu0 0.0
      %481 = vmatpush1.msra.mxu0 0.0
      %482 = vmatprep.subr.mxu0 0.0
      %483 = vmatpush1.msra.mxu0 0.0
      %484 = vmatprep.subr.mxu0 0.0
      %485 = vmatpush1.msra.mxu0 0.0
      %486 = vmatprep.subr.mxu0 0.0
      %487 = vmatpush1.msra.mxu0 0.0
      %488 = vmatprep.subr.mxu0 0.0
      %489 = vmatpush1.msra.mxu0 0.0
      %490 = vmatprep.subr.mxu0 0.0
      %491 = vmatpush1.msra.mxu0 0.0
      %492 = vmatprep.subr.mxu0 0.0
      %493 = vmatpush1.msra.mxu0 0.0
      %494 = vmatprep.subr.mxu0 0.0
      %495 = vmatpush1.msra.mxu0 0.0
      %496 = vmatprep.subr.mxu0 0.0
      %497 = vmatpush1.msra.mxu0 0.0
      %498 = vmatprep.subr.mxu0 0.0
      %499 = vmatpush1.msra.mxu0 0.0
      %500 = vmatprep.subr.mxu0 0.0
      %501 = vmatpush1.msra.mxu0 0.0
      %502 = vmatprep.subr.mxu0 0.0
      %503 = vmatpush1.msra.mxu0 %v448
      %504 = vmatprep.subr.mxu0 0.0
      %505 = vmatpush1.msra.mxu0 %v447
      %506 = vmatprep.subr.mxu0 0.0
      %507 = vmatpush2.msra.mxu0 0.0
      %508 = vmatprep.subr.mxu0 0.0
      %509 = vmatpush2.msra.mxu0 0.0
      %510 = vmatprep.subr.mxu0 0.0
      %511 = vmatpush2.msra.mxu0 0.0
      %512 = vmatprep.subr.mxu0 0.0
      %513 = vmatpush2.msra.mxu0 0.0
      %514 = vmatprep.subr.mxu0 0.0
      %515 = vmatpush2.msra.mxu0 0.0
      %516 = vmatprep.subr.mxu0 0.0
      %517 = vmatpush2.msra.mxu0 0.0
      %518 = vmatprep.subr.mxu0 0.0
      %519 = vmatpush2.msra.mxu0 0.0
      %520 = vmatprep.subr.mxu0 0.0
      %521 = vmatpush2.msra.mxu0 0.0
      %522 = vmatprep.subr.mxu0 0.0
      %523 = vmatpush2.msra.mxu0 0.0
      %524 = vmatprep.subr.mxu0 0.0
      %525 = vmatpush2.msra.mxu0 0.0
      %526 = vmatprep.subr.mxu0 0.0
      %527 = vmatpush2.msra.mxu0 0.0
      %528 = vmatprep.subr.mxu0 0.0
      %529 = vmatpush2.msra.mxu0 0.0
      %530 = vmatprep.subr.mxu0 0.0
      %531 = vmatpush2.msra.mxu0 0.0
      %532 = vmatprep.subr.mxu0 0.0
      %533 = vmatpush2.msra.mxu0 0.0
      %534 = vmatprep.subr.mxu0 0.0
      %535 = vmatpush2.msra.mxu0 0.0
      %536 = vmatprep.subr.mxu0 0.0
      %537 = vmatpush2.msra.mxu0 0.0
      %538 = vmatprep.mubr.f32.mxu0 0.0
      %539 = vmatmul.mubr.f32.gmra.mxu0 %v451
      %v540 = vpop.f32.mrf.mxu0
      %v541 = vadd.f32 0.0, %v540
      %v542 = vpop.f32.mrf.mxu0
      %543 = vmatprep.mubr.f32.mxu0 0.0
      %544 = vmatmul.mubr.f32.gmra.mxu0 %v454
      %v545 = vpop.f32.mrf.mxu0
      %v546 = vadd.f32 0.0, %v545
      %v547 = vpop.f32.mrf.mxu0
      %548 = vmatprep.mubr.f32.mxu0 0.0
      %549 = vmatmul.mubr.f32.gmra.mxu0 %v457
      %v550 = vpop.f32.mrf.mxu0
      %v551 = vadd.f32 0.0, %v550
      %v552 = vpop.f32.mrf.mxu0
      %553 = vmatprep.mubr.f32.mxu0 0.0
      %554 = vmatmul.mubr.f32.gmra.mxu0 %v460
      %v555 = vpop.f32.mrf.mxu0
      %v556 = vadd.f32 0.0, %v555
      %v557 = vpop.f32.mrf.mxu0
      %558 = vmatprep.mubr.f32.mxu0 0.0
      %559 = vmatmul.mubr.f32.gmra.mxu0 %v463
      %v560 = vpop.f32.mrf.mxu0
      %v561 = vadd.f32 0.0, %v560
      %v562 = vpop.f32.mrf.mxu0
      %563 = vmatprep.mubr.f32.mxu0 0.0
      %564 = vmatmul.mubr.f32.gmra.mxu0 %v466
      %v565 = vpop.f32.mrf.mxu0
      %v566 = vadd.f32 0.0, %v565
      %v567 = vpop.f32.mrf.mxu0
      %568 = vmatprep.mubr.f32.mxu0 0.0
      %569 = vmatmul.mubr.f32.gmra.mxu0 %v469
      %v570 = vpop.f32.mrf.mxu0
      %v571 = vadd.f32 0.0, %v570
      %v572 = vpop.f32.mrf.mxu0
      %573 = vmatprep.mubr.f32.mxu0 0.0
      %574 = vmatmul.mubr.f32.gmra.mxu0 %v472
      %v575 = vpop.f32.mrf.mxu0
      %v576 = vadd.f32 0.0, %v575
      %v577 = vpop.f32.mrf.mxu0
      %578 = vdwg.mxu0
      %587 = vrot.lane.b32.xlu0 %v541, 16
      %v588 = vpop.permute.xlu0 %587
      %589 = vrot.lane.b32.xlu0 %v546, 16
      %v590 = vpop.permute.xlu0 %589
      %591 = vrot.lane.b32.xlu0 %v551, 16
      %v592 = vpop.permute.xlu0 %591
      %593 = vrot.lane.b32.xlu0 %v556, 16
      %v594 = vpop.permute.xlu0 %593
      %595 = vrot.lane.b32.xlu0 %v561, 16
      %v596 = vpop.permute.xlu0 %595
      %597 = vrot.lane.b32.xlu0 %v566, 16
      %v598 = vpop.permute.xlu0 %597
      %599 = vrot.lane.b32.xlu0 %v571, 16
      %v600 = vpop.permute.xlu0 %599
      %601 = vrot.lane.b32.xlu0 %v576, 16
      %v602 = vpop.permute.xlu0 %601
      %v611 = vadd.f32 %v386, %v588
      %v612 = vadd.f32 %v391, %v590
      %v613 = vadd.f32 %v396, %v592
      %v614 = vadd.f32 %v401, %v594
      %v615 = vadd.f32 %v406, %v596
      %v616 = vadd.f32 %v411, %v598
      %v617 = vadd.f32 %v416, %v600
      %v618 = vadd.f32 %v421, %v602
      %v619 = vld [vmem:[%s4] sm:$0x1]
      %v621 = vlaneseq
      %v622 = vshrl.u32 %v621, 7
      %v623 = vsub.s32 0, %v622
      %v624 = vrot.slane %v619, %v623
      %625 = vrot.lane.b32.xlu0 %v624, 16
      %v626 = vpop.permute.xlu0 %625
      %v628 = vadd.f32 %v611, %v626
      %v629 = vadd.f32 %v612, %v626
      %v630 = vadd.f32 %v613, %v626
      %v631 = vadd.f32 %v614, %v626
      %v632 = vadd.f32 %v615, %v626
      %v633 = vadd.f32 %v616, %v626
      %v634 = vadd.f32 %v617, %v626
      %v635 = vadd.f32 %v618, %v626
      %v636 = vmax.f32 %v628, 0.0
      %v637 = vmax.f32 %v629, 0.0
      %v638 = vmax.f32 %v630, 0.0
      %v639 = vmax.f32 %v631, 0.0
      %v640 = vmax.f32 %v632, 0.0
      %v641 = vmax.f32 %v633, 0.0
      %v642 = vmax.f32 %v634, 0.0
      %v643 = vmax.f32 %v635, 0.0
      %v644 = vld [vmem:[%s5] sm:$0xff]
      %v645 = vld [vmem:[%s5 + $0x8] sm:$0xff]
      %654 = vrot.lane.b32.xlu0 %v636, 112
      %v655 = vpop.permute.xlu0 %654
      %656 = vrot.lane.b32.xlu0 %v637, 112
      %v657 = vpop.permute.xlu0 %656
      %658 = vrot.lane.b32.xlu0 %v638, 112
      %v659 = vpop.permute.xlu0 %658
      %660 = vrot.lane.b32.xlu0 %v639, 112
      %v661 = vpop.permute.xlu0 %660
      %662 = vrot.lane.b32.xlu0 %v640, 112
      %v663 = vpop.permute.xlu0 %662
      %664 = vrot.lane.b32.xlu0 %v641, 112
      %v665 = vpop.permute.xlu0 %664
      %666 = vrot.lane.b32.xlu0 %v642, 112
      %v667 = vpop.permute.xlu0 %666
      %668 = vrot.lane.b32.xlu0 %v643, 112
      %v669 = vpop.permute.xlu0 %668
      %v670 = vsel %vm449, %v655, 0
      %v672 = vsel %vm449, %v657, 0
      %v674 = vsel %vm449, %v659, 0
      %v676 = vsel %vm449, %v661, 0
      %v678 = vsel %vm449, %v663, 0
      %v680 = vsel %vm449, %v665, 0
      %v682 = vsel %vm449, %v667, 0
      %v684 = vsel %vm449, %v669, 0
      %686 = vmatprep.subr.mxu0 0.0
      %687 = vmatpush1.msra.mxu0 0.0
      %688 = vmatprep.subr.mxu0 0.0
      %689 = vmatpush1.msra.mxu0 0.0
      %690 = vmatprep.subr.mxu0 0.0
      %691 = vmatpush1.msra.mxu0 0.0
      %692 = vmatprep.subr.mxu0 0.0
      %693 = vmatpush1.msra.mxu0 0.0
      %694 = vmatprep.subr.mxu0 0.0
      %695 = vmatpush1.msra.mxu0 0.0
      %696 = vmatprep.subr.mxu0 0.0
      %697 = vmatpush1.msra.mxu0 0.0
      %698 = vmatprep.subr.mxu0 0.0
      %699 = vmatpush1.msra.mxu0 0.0
      %700 = vmatprep.subr.mxu0 0.0
      %701 = vmatpush1.msra.mxu0 0.0
      %702 = vmatprep.subr.mxu0 0.0
      %703 = vmatpush1.msra.mxu0 0.0
      %704 = vmatprep.subr.mxu0 0.0
      %705 = vmatpush1.msra.mxu0 0.0
      %706 = vmatprep.subr.mxu0 0.0
      %707 = vmatpush1.msra.mxu0 0.0
      %708 = vmatprep.subr.mxu0 0.0
      %709 = vmatpush1.msra.mxu0 0.0
      %710 = vmatprep.subr.mxu0 0.0
      %711 = vmatpush1.msra.mxu0 0.0
      %712 = vmatprep.subr.mxu0 0.0
      %713 = vmatpush1.msra.mxu0 0.0
      %714 = vmatprep.subr.mxu0 0.0
      %715 = vmatpush1.msra.mxu0 %v645
      %716 = vmatprep.subr.mxu0 0.0
      %717 = vmatpush1.msra.mxu0 %v644
      %718 = vmatprep.subr.mxu0 0.0
      %719 = vmatpush2.msra.mxu0 0.0
      %720 = vmatprep.subr.mxu0 0.0
      %721 = vmatpush2.msra.mxu0 0.0
      %722 = vmatprep.subr.mxu0 0.0
      %723 = vmatpush2.msra.mxu0 0.0
      %724 = vmatprep.subr.mxu0 0.0
      %725 = vmatpush2.msra.mxu0 0.0
      %726 = vmatprep.subr.mxu0 0.0
      %727 = vmatpush2.msra.mxu0 0.0
      %728 = vmatprep.subr.mxu0 0.0
      %729 = vmatpush2.msra.mxu0 0.0
      %730 = vmatprep.subr.mxu0 0.0
      %731 = vmatpush2.msra.mxu0 0.0
      %732 = vmatprep.subr.mxu0 0.0
      %733 = vmatpush2.msra.mxu0 0.0
      %734 = vmatprep.subr.mxu0 0.0
      %735 = vmatpush2.msra.mxu0 0.0
      %736 = vmatprep.subr.mxu0 0.0
      %737 = vmatpush2.msra.mxu0 0.0
      %738 = vmatprep.subr.mxu0 0.0
      %739 = vmatpush2.msra.mxu0 0.0
      %740 = vmatprep.subr.mxu0 0.0
      %741 = vmatpush2.msra.mxu0 0.0
      %742 = vmatprep.subr.mxu0 0.0
      %743 = vmatpush2.msra.mxu0 0.0
      %744 = vmatprep.subr.mxu0 0.0
      %745 = vmatpush2.msra.mxu0 0.0
      %746 = vmatprep.subr.mxu0 0.0
      %747 = vmatpush2.msra.mxu0 0.0
      %748 = vmatprep.subr.mxu0 0.0
      %749 = vmatpush2.msra.mxu0 0.0
      %750 = vmatprep.mubr.f32.mxu0 0.0
      %751 = vmatmul.mubr.f32.gmra.mxu0 %v670
      %v752 = vpop.f32.mrf.mxu0
      %v753 = vadd.f32 0.0, %v752
      %v754 = vpop.f32.mrf.mxu0
      %755 = vmatprep.mubr.f32.mxu0 0.0
      %756 = vmatmul.mubr.f32.gmra.mxu0 %v672
      %v757 = vpop.f32.mrf.mxu0
      %v758 = vadd.f32 0.0, %v757
      %v759 = vpop.f32.mrf.mxu0
      %760 = vmatprep.mubr.f32.mxu0 0.0
      %761 = vmatmul.mubr.f32.gmra.mxu0 %v674
      %v762 = vpop.f32.mrf.mxu0
      %v763 = vadd.f32 0.0, %v762
      %v764 = vpop.f32.mrf.mxu0
      %765 = vmatprep.mubr.f32.mxu0 0.0
      %766 = vmatmul.mubr.f32.gmra.mxu0 %v676
      %v767 = vpop.f32.mrf.mxu0
      %v768 = vadd.f32 0.0, %v767
      %v769 = vpop.f32.mrf.mxu0
      %770 = vmatprep.mubr.f32.mxu0 0.0
      %771 = vmatmul.mubr.f32.gmra.mxu0 %v678
      %v772 = vpop.f32.mrf.mxu0
      %v773 = vadd.f32 0.0, %v772
      %v774 = vpop.f32.mrf.mxu0
      %775 = vmatprep.mubr.f32.mxu0 0.0
      %776 = vmatmul.mubr.f32.gmra.mxu0 %v680
      %v777 = vpop.f32.mrf.mxu0
      %v778 = vadd.f32 0.0, %v777
      %v779 = vpop.f32.mrf.mxu0
      %780 = vmatprep.mubr.f32.mxu0 0.0
      %781 = vmatmul.mubr.f32.gmra.mxu0 %v682
      %v782 = vpop.f32.mrf.mxu0
      %v783 = vadd.f32 0.0, %v782
      %v784 = vpop.f32.mrf.mxu0
      %785 = vmatprep.mubr.f32.mxu0 0.0
      %786 = vmatmul.mubr.f32.gmra.mxu0 %v684
      %v787 = vpop.f32.mrf.mxu0
      %v788 = vadd.f32 0.0, %v787
      %v789 = vpop.f32.mrf.mxu0
      %790 = vdwg.mxu0
      %799 = vrot.lane.b32.xlu0 %v753, 16
      %v800 = vpop.permute.xlu0 %799
      %801 = vrot.lane.b32.xlu0 %v758, 16
      %v802 = vpop.permute.xlu0 %801
      %803 = vrot.lane.b32.xlu0 %v763, 16
      %v804 = vpop.permute.xlu0 %803
      %805 = vrot.lane.b32.xlu0 %v768, 16
      %v806 = vpop.permute.xlu0 %805
      %807 = vrot.lane.b32.xlu0 %v773, 16
      %v808 = vpop.permute.xlu0 %807
      %809 = vrot.lane.b32.xlu0 %v778, 16
      %v810 = vpop.permute.xlu0 %809
      %811 = vrot.lane.b32.xlu0 %v783, 16
      %v812 = vpop.permute.xlu0 %811
      %813 = vrot.lane.b32.xlu0 %v788, 16
      %v814 = vpop.permute.xlu0 %813
      %v823 = vadd.f32 %v541, %v800
      %v824 = vadd.f32 %v546, %v802
      %v825 = vadd.f32 %v551, %v804
      %v826 = vadd.f32 %v556, %v806
      %v827 = vadd.f32 %v561, %v808
      %v828 = vadd.f32 %v566, %v810
      %v829 = vadd.f32 %v571, %v812
      %v830 = vadd.f32 %v576, %v814
      %v831 = vld [vmem:[%s6] sm:$0x1]
      %v833 = vlaneseq
      %v834 = vshrl.u32 %v833, 7
      %v835 = vsub.s32 0, %v834
      %v836 = vrot.slane %v831, %v835
      %837 = vrot.lane.b32.xlu0 %v836, 16
      %v838 = vpop.permute.xlu0 %837
      %v840 = vadd.f32 %v823, %v838
      %v841 = vadd.f32 %v824, %v838
      %v842 = vadd.f32 %v825, %v838
      %v843 = vadd.f32 %v826, %v838
      %v844 = vadd.f32 %v827, %v838
      %v845 = vadd.f32 %v828, %v838
      %v846 = vadd.f32 %v829, %v838
      %v847 = vadd.f32 %v830, %v838
      %856 = vrot.lane.b32.xlu0 %v840, 112
      %v857 = vpop.permute.xlu0 %856
      %858 = vrot.lane.b32.xlu0 %v841, 112
      %v859 = vpop.permute.xlu0 %858
      %860 = vrot.lane.b32.xlu0 %v842, 112
      %v861 = vpop.permute.xlu0 %860
      %862 = vrot.lane.b32.xlu0 %v843, 112
      %v863 = vpop.permute.xlu0 %862
      %864 = vrot.lane.b32.xlu0 %v844, 112
      %v865 = vpop.permute.xlu0 %864
      %866 = vrot.lane.b32.xlu0 %v845, 112
      %v867 = vpop.permute.xlu0 %866
      %868 = vrot.lane.b32.xlu0 %v846, 112
      %v869 = vpop.permute.xlu0 %868
      %870 = vrot.lane.b32.xlu0 %v847, 112
      %v871 = vpop.permute.xlu0 %870
      %vm880 = vcmask 31744
      %881 = vst.msk [vmem:[%s280] sm:$0xff] %vm880, %v857
      %882 = vst.msk [vmem:[%s280 + $0x8] sm:$0xff] %vm880, %v859
      %883 = vst.msk [vmem:[%s280 + $0x10] sm:$0xff] %vm880, %v861
      %884 = vst.msk [vmem:[%s280 + $0x18] sm:$0xff] %vm880, %v863
      %885 = vst.msk [vmem:[%s280 + $0x20] sm:$0xff] %vm880, %v865
      %886 = vst.msk [vmem:[%s280 + $0x28] sm:$0xff] %vm880, %v867
      %887 = vst.msk [vmem:[%s280 + $0x30] sm:$0xff] %vm880, %v869
      %888 = vst.msk [vmem:[%s280 + $0x38] sm:$0xff] %vm880, %v871
      %s889 = smul.u32 8, %s18
      %p890 = scmp.lt.s32.totalorder %s889, 31
      %s891 = scalar_select %p890, %s889, 31
      %s892 = smul.addr %s891, 8
      %s893 = scalar_lea.vmem %s7, %s892
      // Predicated region
      $region49: #{tpu_custom_call.1} parent=47 // pred_check
        %p894 = pneg %p188
      $region50: #{tpu_custom_call.1} parent=47 // pred_check_branch
        %896 = sbr.rel (%p894) target = $region52
      $region51: #{tpu_custom_call.1} parent=47 // pred_region
        %s897 = smul.u32 8, %s18
      $region52: #{tpu_custom_call.1} parent=47 // pred_fallthru
        _
    $region48: #{tpu_custom_call.1} parent=5 // pred_fallthru
      _
    %p898 = scmp.le.s32.totalorder 2, %s13
    // Predicated region
    $region53: #{tpu_custom_call.1} parent=5 // pred_check
      %p899 = pneg %p898
    $region54: #{tpu_custom_call.1} parent=5 // pred_check_branch
      %901 = sbr.rel (%p899) target = $region56
    $region55: #{tpu_custom_call.1} parent=5 // pred_region
      %s902 = ssub.s32 %s13, 2
      // Predicated region
      $region57: #{tpu_custom_call.1} parent=55 // pred_check
        %p903 = pneg %p194
      $region58: #{tpu_custom_call.1} parent=55 // pred_check_branch
        %905 = sbr.rel (%p903) target = $region60
      $region59: #{tpu_custom_call.1} parent=55 // pred_region
        %s906 = smul.u32 8, %s19
        %p907 = scmp.lt.s32.totalorder %s906, 31
        %s908 = scalar_select %p907, %s906, 31
        %s909 = smul.addr %s908, 8
        %s910 = scalar_lea.vmem %s7, %s909
      $region60: #{tpu_custom_call.1} parent=55 // pred_fallthru
        _
    $region56: #{tpu_custom_call.1} parent=5 // pred_fallthru
      _
  $region6: #{tpu_custom_call.1} parent=0 // loop_footer
    %s17 = sadd.s32 1, %s13
  $region7: #{tpu_custom_call.1} parent=0 // loop_footer_branch
    %12 = sbr.rel target = $region3
  $region8: #{tpu_custom_call.1} parent=0 // loop_exit
    _

</llo_original>
